<compile_context>
chip_gen: v6e
topology: v6e:2x2x1
jax: 0.10.0
libtpu: 0.0.40
codegen_flags: <defaults>
</compile_context>

<pallas_src>
import functools

import jax
import jax.numpy as jnp
from jax.experimental import pallas as pl
from jax.experimental.pallas import tpu as pltpu


_NEG_BIG = -1e30          # instead of -inf: avoids inf-inf NaNs in masking
_X_SINGLE_BUFFER_BYTES = 2 * 1024 * 1024   # single-buffer x above this size


def _round_up(v, mult):
    return ((v + mult - 1) // mult) * mult


# ----------------------------------------------------------------------------
# Main kernel: one (tm, tn) logits tile per grid step + online LSE over j.
# ----------------------------------------------------------------------------
def _amsoftmax_kernel(lb_ref, sw_ref, x_ref, w_ref, logits_ref, lossrow_ref,
                      inv_xn_sc, m_sc, l_sc, t_sc,
                      *, m, s, n_classes, c_padded, tn):
    j = pl.program_id(1)
    nj = pl.num_programs(1)

    x = x_ref[...]                                   # (tm, D): one load/step

    # Per-B-tile init: 1/||x|| (f32 math) and the online-softmax state.
    @pl.when(j == 0)
    def _init():
        xf = x.astype(jnp.float32)
        ss = jnp.sum(xf * xf, axis=1, keepdims=True)
        inv_xn_sc[...] = 1.0 / jnp.maximum(jnp.sqrt(ss), 1e-12)
        m_sc[...] = jnp.full_like(m_sc, _NEG_BIG)
        l_sc[...] = jnp.zeros_like(l_sc)
        t_sc[...] = jnp.zeros_like(t_sc)

    # MXU on raw (un-normalized) W; row/col normalization and the s scale are
    # folded into two broadcast multiplies (sw = s / ||w||_col, precomputed).
    raw = jnp.dot(x, w_ref[...], preferred_element_type=jnp.float32)
    scaled = raw * inv_xn_sc[...] * sw_ref[...]                    # (tm, tn)

    # Margin at the label position: single select over `scaled`.
    lb = lb_ref[...]                                               # (tm, 1)
    col = jax.lax.broadcasted_iota(jnp.int32, (1, tn), 1) + j * tn  # (1, tn)
    is_target = col == lb                                          # (tm, tn)
    logits = jnp.where(is_target, scaled - jnp.float32(s * m), scaled)
    logits_ref[...] = logits.astype(logits_ref.dtype)

    # Online logsumexp over class tiles (mask only if padded classes exist).
    if c_padded:
        masked = jnp.where(col < n_classes, logits, jnp.float32(_NEG_BIG))
    else:
        masked = logits
    tile_max = jnp.max(masked, axis=1, keepdims=True)
    m_new = jnp.maximum(m_sc[...], tile_max)
    alpha = jnp.exp(m_sc[...] - m_new)
    l_sc[...] = alpha * l_sc[...] + jnp.sum(jnp.exp(masked - m_new),
                                            axis=1, keepdims=True)
    m_sc[...] = m_new
    t_sc[...] = t_sc[...] + jnp.sum(jnp.where(is_target, logits, 0.0),
                                    axis=1, keepdims=True)

    # Finalize per-row CE contribution on the last class tile.
    @pl.when(j == nj - 1)
    def _finalize():
        lossrow_ref[...] = m_sc[...] + jnp.log(l_sc[...]) - t_sc[...]


def amsoftmax_forward(x, W, lb, *, m=0.35, s=30.0, use_bf16=False,
                      logits_dtype=jnp.float32):
    """x: (B, in_feats), W: (in_feats, n_classes), lb: (B,) int.

    Returns (scalar mean CE loss, (B, n_classes) scaled margin logits),
    matching the PyTorch AMSoftmax.forward semantics.
    """
    B, D = x.shape
    D2, C = W.shape
    assert D == D2 and lb.shape[0] == B

    # ---- VMEM budget (v7x: 64 MiB physical; v5e/v6e: 128 MiB) -------------
    try:
        vmem_cap = int(pltpu.get_tpu_info().vmem_capacity_bytes)
    except Exception:
        vmem_cap = 64 * 1024 * 1024
    vmem_budget = int(0.75 * vmem_cap)

    x_itemsize = 2 if use_bf16 else 4
    w_itemsize = 2 if use_bf16 else 4
    out_itemsize = jnp.dtype(logits_dtype).itemsize

    # ---- tile selection: minimize B padding, maximize tm (cuts W re-reads).
    TM_CAP = 512
    n_btiles = max(1, -(-B // TM_CAP))
    tm = max(8, min(_round_up(-(-B // n_btiles), 8), TM_CAP))
    tn = min(_round_up(C, 128), 512)

    def vmem_need(tm_, tn_):
        x_tile = tm_ * D * x_itemsize
        x_bufs = 1 if x_tile >= _X_SINGLE_BUFFER_BYTES else 2
        return (x_bufs * x_tile                  # x tile(s)
                + 2 * D * tn_ * w_itemsize       # W stream (double-buffered)
                + 2 * tm_ * tn_ * out_itemsize   # logits writeback
                + 2 * tn_ * 4                    # s/||w|| row
                + 16 * tm_ * 4)                  # labels, loss row, scratch

    while vmem_need(tm, tn) > vmem_budget and tn > 128:
        tn -= 128
    while vmem_need(tm, tn) > vmem_budget and tm > 8:
        tm = max(8, _round_up(tm // 2, 8))

    B_pad = _round_up(B, tm)
    C_pad = _round_up(C, tn)

    # Raise the scoped-VMEM limit above the 32 MiB default only when needed.
    need = vmem_need(tm, tn)
    vmem_limit = None
    if need > 30 * 1024 * 1024:
        vmem_limit = min(int(need * 1.25) + (4 << 20), int(0.9 * vmem_cap))

    # ---- inputs (cast once here; never per grid step) ----------------------
    compute_dtype = jnp.bfloat16 if use_bf16 else jnp.float32
    xf = x.astype(jnp.float32)
    Wf = W.astype(jnp.float32)

    # Tiny per-column s/||w|| vector: replaces the Wn materialization pass.
    inv_wn = 1.0 / jnp.maximum(
        jnp.sqrt(jnp.sum(Wf * Wf, axis=0, keepdims=True)), 1e-12)
    sw_p = jnp.pad(jnp.float32(s) * inv_wn, ((0, 0), (0, C_pad - C)))

    x_p = jnp.pad(xf, ((0, B_pad - B), (0, 0))).astype(compute_dtype)
    W_p = jnp.pad(Wf, ((0, 0), (0, C_pad - C))).astype(compute_dtype)
    lb_p = jnp.pad(lb.astype(jnp.int32), (0, B_pad - B)).reshape(B_pad, 1)

    # x block index is constant over the class axis -> single-buffer it when
    # the tile is big enough that the saved VMEM buffer actually matters.
    if tm * D * x_itemsize >= _X_SINGLE_BUFFER_BYTES:
        x_spec = pl.BlockSpec((tm, D), lambda i, j: (i, 0),
                              pipeline_mode=pl.Buffered(1))
    else:
        x_spec = pl.BlockSpec((tm, D), lambda i, j: (i, 0))

    kernel = functools.partial(
        _amsoftmax_kernel, m=float(m), s=float(s), n_classes=C,
        c_padded=(C_pad != C), tn=tn)

    logits_p, loss_rows = pl.pallas_call(
        kernel,
        out_shape=(
            jax.ShapeDtypeStruct((B_pad, C_pad), logits_dtype),
            jax.ShapeDtypeStruct((B_pad, 1), jnp.float32),
        ),
        grid_spec=pltpu.PrefetchScalarGridSpec(
            num_scalar_prefetch=0,
            grid=(B_pad // tm, C_pad // tn),
            in_specs=[
                pl.BlockSpec((tm, 1), lambda i, j: (i, 0)),   # labels
                pl.BlockSpec((1, tn), lambda i, j: (0, j)),   # s / ||w||_col
                x_spec,                                       # x (resident over j)
                pl.BlockSpec((D, tn), lambda i, j: (0, j)),   # raw W (streams)
            ],
            out_specs=(
                pl.BlockSpec((tm, tn), lambda i, j: (i, j)),  # margin logits
                pl.BlockSpec((tm, 1), lambda i, j: (i, 0)),   # per-row CE
            ),
            scratch_shapes=[
                pltpu.VMEM((tm, 1), jnp.float32),   # 1/||x||
                pltpu.VMEM((tm, 1), jnp.float32),   # running max
                pltpu.VMEM((tm, 1), jnp.float32),   # running sum
                pltpu.VMEM((tm, 1), jnp.float32),   # target logit
            ],
        ),
        compiler_params=pltpu.CompilerParams(
            dimension_semantics=("parallel", "arbitrary"),
            vmem_limit_bytes=vmem_limit),
    )(lb_p, sw_p, x_p, W_p)

    logits = logits_p[:B, :C]
    loss = jnp.mean(loss_rows[:B, 0])   # mean over real rows only
    return loss, logits


# ----------------------------------------------------------------------------
# Pure-JAX reference (matches the PyTorch module's forward).
# ----------------------------------------------------------------------------
def _reference(x, W, lb, m=0.35, s=30.0):
    xn = x / jnp.maximum(jnp.linalg.norm(x, axis=1, keepdims=True), 1e-12)
    wn = W / jnp.maximum(jnp.linalg.norm(W, axis=0, keepdims=True), 1e-12)
    costh = xn @ wn
    onehot = jax.nn.one_hot(lb, W.shape[1], dtype=costh.dtype)
    logits = s * (costh - m * onehot)
    logp = jax.nn.log_softmax(logits, axis=1)
    loss = -jnp.mean(jnp.take_along_axis(logp, lb[:, None], axis=1))
    return loss, logits


if __name__ == "__main__":
    B, in_feats, n_classes = 8, 32, 10
    m, s = 0.35, 30.0

    key = jax.random.PRNGKey(0)
    kx, kw, kl = jax.random.split(key, 3)

    x = jax.random.normal(kx, (B, in_feats), dtype=jnp.float32)
    # xavier_normal_ init for W (in_feats, n_classes), gain=1.
    std = (2.0 / (in_feats + n_classes)) ** 0.5
    W = std * jax.random.normal(kw, (in_feats, n_classes), dtype=jnp.float32)
    lb = jax.random.randint(kl, (B,), 0, n_classes, dtype=jnp.int32)

    loss, logits = amsoftmax_forward(x, W, lb, m=m, s=s)
    jax.block_until_ready((loss, logits))

    ref_loss, ref_logits = _reference(x, W, lb, m=m, s=s)
    assert jnp.allclose(logits, ref_logits, atol=1e-4, rtol=1e-4)
    assert jnp.allclose(loss, ref_loss, atol=1e-4, rtol=1e-4)

    print("KERNEL_OK")
</pallas_src>

<mosaic_0001>
module attributes {stable_mosaic.version = 11 : i64} {
  func.func @_amsoftmax_kernel(%arg0: i32, %arg1: i32, %arg2: memref<8x1xi32, #tpu.memory_space<vmem>>, %arg3: memref<1x128xf32, #tpu.memory_space<vmem>>, %arg4: memref<8x32xf32, #tpu.memory_space<vmem>>, %arg5: memref<32x128xf32, #tpu.memory_space<vmem>>, %arg6: memref<8x128xf32, #tpu.memory_space<vmem>>, %arg7: memref<8x1xf32, #tpu.memory_space<vmem>>, %arg8: memref<8x1xf32, #tpu.memory_space<vmem>>, %arg9: memref<8x1xf32, #tpu.memory_space<vmem>>, %arg10: memref<8x1xf32, #tpu.memory_space<vmem>>, %arg11: memref<8x1xf32, #tpu.memory_space<vmem>>) attributes {dimension_semantics = [#tpu.dimension_semantics<parallel>, #tpu.dimension_semantics<arbitrary>], iteration_bounds = array<i64: 1, 1>, scalar_prefetch = 0 : i64, scratch_operands = 4 : i64, tpu.core_type = #tpu.core_type<tc>, window_params = [{transform_indices = @transform_0, window_bounds = array<i64: 8, 1>}, {transform_indices = @transform_1, window_bounds = array<i64: 1, 128>}, {transform_indices = @transform_2, window_bounds = array<i64: 8, 32>}, {transform_indices = @transform_3, window_bounds = array<i64: 32, 128>}, {transform_indices = @transform_4, window_bounds = array<i64: 8, 128>}, {transform_indices = @transform_5, window_bounds = array<i64: 8, 1>}]} {
    %c0 = arith.constant 0 : index
    %c0_0 = arith.constant 0 : index
    %0 = vector.load %arg4[%c0, %c0_0] : memref<8x32xf32, #tpu.memory_space<vmem>>, vector<8x32xf32>
    %c0_i32 = arith.constant 0 : i32
    %1 = arith.cmpi eq, %arg1, %c0_i32 : i32
    %2 = arith.extui %1 : i1 to i32
    %c0_i32_1 = arith.constant 0 : i32
    %3 = arith.cmpi ne, %2, %c0_i32_1 : i32
    scf.if %3 {
      %57 = arith.mulf %0, %0 : vector<8x32xf32>
      %cst_34 = arith.constant dense<0.000000e+00> : vector<8xf32>
      %58 = vector.multi_reduction <add>, %57, %cst_34 [1] : vector<8x32xf32> to vector<8xf32>
      %59 = vector.shape_cast %58 : vector<8xf32> to vector<8x1xf32>
      %60 = math.sqrt %59 : vector<8x1xf32>
      %cst_35 = arith.constant 9.99999996E-13 : f32
      %61 = vector.broadcast %cst_35 : f32 to vector<8x1xf32>
      %62 = arith.maximumf %60, %61 : vector<8x1xf32>
      %cst_36 = arith.constant 1.000000e+00 : f32
      %63 = vector.broadcast %cst_36 : f32 to vector<8x1xf32>
      %64 = arith.divf %63, %62 : vector<8x1xf32>
      %c0_37 = arith.constant 0 : index
      %c0_38 = arith.constant 0 : index
      %65 = vector.load %arg8[%c0_37, %c0_38] : memref<8x1xf32, #tpu.memory_space<vmem>>, vector<8x1xf32>
      tpu.vector_store %arg8[%c0_37, %c0_38], %64 {strides = array<i32>} : memref<8x1xf32, #tpu.memory_space<vmem>>, vector<8x1xf32>,
      %cst_39 = arith.constant -1.000000e+30 : f32
      %66 = vector.broadcast %cst_39 : f32 to vector<8x1xf32>
      %c0_40 = arith.constant 0 : index
      %c0_41 = arith.constant 0 : index
      %67 = vector.load %arg9[%c0_40, %c0_41] : memref<8x1xf32, #tpu.memory_space<vmem>>, vector<8x1xf32>
      tpu.vector_store %arg9[%c0_40, %c0_41], %66 {strides = array<i32>} : memref<8x1xf32, #tpu.memory_space<vmem>>, vector<8x1xf32>,
      %cst_42 = arith.constant 0.000000e+00 : f32
      %68 = vector.broadcast %cst_42 : f32 to vector<8x1xf32>
      %c0_43 = arith.constant 0 : index
      %c0_44 = arith.constant 0 : index
      %69 = vector.load %arg10[%c0_43, %c0_44] : memref<8x1xf32, #tpu.memory_space<vmem>>, vector<8x1xf32>
      tpu.vector_store %arg10[%c0_43, %c0_44], %68 {strides = array<i32>} : memref<8x1xf32, #tpu.memory_space<vmem>>, vector<8x1xf32>,
      %cst_45 = arith.constant 0.000000e+00 : f32
      %70 = vector.broadcast %cst_45 : f32 to vector<8x1xf32>
      %c0_46 = arith.constant 0 : index
      %c0_47 = arith.constant 0 : index
      %71 = vector.load %arg11[%c0_46, %c0_47] : memref<8x1xf32, #tpu.memory_space<vmem>>, vector<8x1xf32>
      tpu.vector_store %arg11[%c0_46, %c0_47], %70 {strides = array<i32>} : memref<8x1xf32, #tpu.memory_space<vmem>>, vector<8x1xf32>,
    } else {
    }
    %c0_2 = arith.constant 0 : index
    %c0_3 = arith.constant 0 : index
    %4 = vector.load %arg5[%c0_2, %c0_3] : memref<32x128xf32, #tpu.memory_space<vmem>>, vector<32x128xf32>
    %cst = arith.constant dense<0.000000e+00> : vector<8x128xf32>
    %5 = tpu.matmul %0, %4, %cst {dimension_numbers = #tpu.dot_dimension_numbers<[1], [0], [0], [1], [0, 0, 1, 1], [], []>} : vector<8x32xf32>, vector<32x128xf32>, vector<8x128xf32> -> vector<8x128xf32>
    %c0_4 = arith.constant 0 : index
    %c0_5 = arith.constant 0 : index
    %6 = vector.load %arg8[%c0_4, %c0_5] : memref<8x1xf32, #tpu.memory_space<vmem>>, vector<8x1xf32>
    %7 = vector.broadcast %6 : vector<8x1xf32> to vector<8x128xf32>
    %8 = arith.mulf %5, %7 : vector<8x128xf32>
    %c0_6 = arith.constant 0 : index
    %c0_7 = arith.constant 0 : index
    %9 = vector.load %arg3[%c0_6, %c0_7] : memref<1x128xf32, #tpu.memory_space<vmem>>, vector<1x128xf32>
    %10 = vector.broadcast %9 : vector<1x128xf32> to vector<8x128xf32>
    %11 = arith.mulf %8, %10 : vector<8x128xf32>
    %c0_8 = arith.constant 0 : index
    %c0_9 = arith.constant 0 : index
    %12 = vector.load %arg2[%c0_8, %c0_9] : memref<8x1xi32, #tpu.memory_space<vmem>>, vector<8x1xi32>
    %13 = tpu.iota {dimensions = array<i32: 1>} : vector<1x128xi32>
    %c128_i32 = arith.constant 128 : i32
    %14 = arith.muli %arg1, %c128_i32 : i32
    %15 = vector.broadcast %14 : i32 to vector<1x128xi32>
    %16 = arith.addi %13, %15 : vector<1x128xi32>
    %17 = vector.broadcast %16 : vector<1x128xi32> to vector<8x128xi32>
    %18 = vector.broadcast %12 : vector<8x1xi32> to vector<8x128xi32>
    %19 = arith.cmpi eq, %17, %18 : vector<8x128xi32>
    %cst_10 = arith.constant 1.050000e+01 : f32
    %20 = vector.broadcast %cst_10 : f32 to vector<8x128xf32>
    %21 = arith.subf %11, %20 : vector<8x128xf32>
    %22 = arith.select %19, %21, %11 : vector<8x128xi1>, vector<8x128xf32>
    %c0_11 = arith.constant 0 : index
    %c0_12 = arith.constant 0 : index
    %23 = vector.load %arg6[%c0_11, %c0_12] : memref<8x128xf32, #tpu.memory_space<vmem>>, vector<8x128xf32>
    tpu.vector_store %arg6[%c0_11, %c0_12], %22 {strides = array<i32>} : memref<8x128xf32, #tpu.memory_space<vmem>>, vector<8x128xf32>,
    %c10_i32 = arith.constant 10 : i32
    %24 = vector.broadcast %c10_i32 : i32 to vector<1x128xi32>
    %25 = arith.cmpi slt, %16, %24 : vector<1x128xi32>
    %cst_13 = arith.constant -1.000000e+30 : f32
    %26 = vector.shape_cast %25 : vector<1x128xi1> to vector<1x128xi1>
    %27 = vector.broadcast %26 : vector<1x128xi1> to vector<8x128xi1>
    %28 = vector.broadcast %cst_13 : f32 to vector<8x128xf32>
    %29 = arith.select %27, %22, %28 : vector<8x128xi1>, vector<8x128xf32>
    %cst_14 = arith.constant dense<0xFF800000> : vector<8xf32>
    %30 = vector.multi_reduction <maximumf>, %29, %cst_14 [1] : vector<8x128xf32> to vector<8xf32>
    %31 = vector.shape_cast %30 : vector<8xf32> to vector<8x1xf32>
    %c0_15 = arith.constant 0 : index
    %c0_16 = arith.constant 0 : index
    %32 = vector.load %arg9[%c0_15, %c0_16] : memref<8x1xf32, #tpu.memory_space<vmem>>, vector<8x1xf32>
    %33 = arith.maximumf %32, %31 : vector<8x1xf32>
    %c0_17 = arith.constant 0 : index
    %c0_18 = arith.constant 0 : index
    %34 = vector.load %arg9[%c0_17, %c0_18] : memref<8x1xf32, #tpu.memory_space<vmem>>, vector<8x1xf32>
    %35 = arith.subf %34, %33 : vector<8x1xf32>
    %36 = math.exp %35 : vector<8x1xf32>
    %c0_19 = arith.constant 0 : index
    %c0_20 = arith.constant 0 : index
    %37 = vector.load %arg10[%c0_19, %c0_20] : memref<8x1xf32, #tpu.memory_space<vmem>>, vector<8x1xf32>
    %38 = arith.mulf %36, %37 : vector<8x1xf32>
    %39 = vector.broadcast %33 : vector<8x1xf32> to vector<8x128xf32>
    %40 = arith.subf %29, %39 : vector<8x128xf32>
    %41 = math.exp %40 : vector<8x128xf32>
    %cst_21 = arith.constant dense<0.000000e+00> : vector<8xf32>
    %42 = vector.multi_reduction <add>, %41, %cst_21 [1] : vector<8x128xf32> to vector<8xf32>
    %43 = vector.shape_cast %42 : vector<8xf32> to vector<8x1xf32>
    %44 = arith.addf %38, %43 : vector<8x1xf32>
    %c0_22 = arith.constant 0 : index
    %c0_23 = arith.constant 0 : index
    %45 = vector.load %arg10[%c0_22, %c0_23] : memref<8x1xf32, #tpu.memory_space<vmem>>, vector<8x1xf32>
    tpu.vector_store %arg10[%c0_22, %c0_23], %44 {strides = array<i32>} : memref<8x1xf32, #tpu.memory_space<vmem>>, vector<8x1xf32>,
    %c0_24 = arith.constant 0 : index
    %c0_25 = arith.constant 0 : index
    %46 = vector.load %arg9[%c0_24, %c0_25] : memref<8x1xf32, #tpu.memory_space<vmem>>, vector<8x1xf32>
    tpu.vector_store %arg9[%c0_24, %c0_25], %33 {strides = array<i32>} : memref<8x1xf32, #tpu.memory_space<vmem>>, vector<8x1xf32>,
    %c0_26 = arith.constant 0 : index
    %c0_27 = arith.constant 0 : index
    %47 = vector.load %arg11[%c0_26, %c0_27] : memref<8x1xf32, #tpu.memory_space<vmem>>, vector<8x1xf32>
    %cst_28 = arith.constant 0.000000e+00 : f32
    %48 = vector.broadcast %cst_28 : f32 to vector<8x128xf32>
    %49 = arith.select %19, %22, %48 : vector<8x128xi1>, vector<8x128xf32>
    %cst_29 = arith.constant dense<0.000000e+00> : vector<8xf32>
    %50 = vector.multi_reduction <add>, %49, %cst_29 [1] : vector<8x128xf32> to vector<8xf32>
    %51 = vector.shape_cast %50 : vector<8xf32> to vector<8x1xf32>
    %52 = arith.addf %47, %51 : vector<8x1xf32>
    %c0_30 = arith.constant 0 : index
    %c0_31 = arith.constant 0 : index
    %53 = vector.load %arg11[%c0_30, %c0_31] : memref<8x1xf32, #tpu.memory_space<vmem>>, vector<8x1xf32>
    tpu.vector_store %arg11[%c0_30, %c0_31], %52 {strides = array<i32>} : memref<8x1xf32, #tpu.memory_space<vmem>>, vector<8x1xf32>,
    %c0_i32_32 = arith.constant 0 : i32
    %54 = arith.cmpi eq, %arg1, %c0_i32_32 : i32
    %55 = arith.extui %54 : i1 to i32
    %c0_i32_33 = arith.constant 0 : i32
    %56 = arith.cmpi ne, %55, %c0_i32_33 : i32
    scf.if %56 {
      %c0_34 = arith.constant 0 : index
      %c0_35 = arith.constant 0 : index
      %57 = vector.load %arg9[%c0_34, %c0_35] : memref<8x1xf32, #tpu.memory_space<vmem>>, vector<8x1xf32>
      %c0_36 = arith.constant 0 : index
      %c0_37 = arith.constant 0 : index
      %58 = vector.load %arg10[%c0_36, %c0_37] : memref<8x1xf32, #tpu.memory_space<vmem>>, vector<8x1xf32>
      %59 = math.log %58 : vector<8x1xf32>
      %60 = arith.addf %57, %59 : vector<8x1xf32>
      %c0_38 = arith.constant 0 : index
      %c0_39 = arith.constant 0 : index
      %61 = vector.load %arg11[%c0_38, %c0_39] : memref<8x1xf32, #tpu.memory_space<vmem>>, vector<8x1xf32>
      %62 = arith.subf %60, %61 : vector<8x1xf32>
      %c0_40 = arith.constant 0 : index
      %c0_41 = arith.constant 0 : index
      %63 = vector.load %arg7[%c0_40, %c0_41] : memref<8x1xf32, #tpu.memory_space<vmem>>, vector<8x1xf32>
      tpu.vector_store %arg7[%c0_40, %c0_41], %62 {strides = array<i32>} : memref<8x1xf32, #tpu.memory_space<vmem>>, vector<8x1xf32>,
    } else {
    }
    return
  }
  func.func @transform_0(%arg0: i32, %arg1: i32) -> (i32, i32) {
    %c0_i32 = arith.constant 0 : i32
    %c0_i32_0 = arith.constant 0 : i32
    return %arg0, %c0_i32 : i32, i32
  }
  func.func @transform_1(%arg0: i32, %arg1: i32) -> (i32, i32) {
    %c0_i32 = arith.constant 0 : i32
    %c0_i32_0 = arith.constant 0 : i32
    return %c0_i32, %arg1 : i32, i32
  }
  func.func @transform_2(%arg0: i32, %arg1: i32) -> (i32, i32) {
    %c0_i32 = arith.constant 0 : i32
    %c0_i32_0 = arith.constant 0 : i32
    return %arg0, %c0_i32 : i32, i32
  }
  func.func @transform_3(%arg0: i32, %arg1: i32) -> (i32, i32) {
    %c0_i32 = arith.constant 0 : i32
    %c0_i32_0 = arith.constant 0 : i32
    return %c0_i32, %arg1 : i32, i32
  }
  func.func @transform_4(%arg0: i32, %arg1: i32) -> (i32, i32) {
    %c0_i32 = arith.constant 0 : i32
    return %arg0, %arg1 : i32, i32
  }
  func.func @transform_5(%arg0: i32, %arg1: i32) -> (i32, i32) {
    %c0_i32 = arith.constant 0 : i32
    %c0_i32_0 = arith.constant 0 : i32
    return %arg0, %c0_i32 : i32, i32
  }
}

</mosaic_0001>

<llo_original>
// kernel: tpu_custom_call.1
$region0: #{tpu_custom_call.1}
  #allocation0 [shape = 'u32[]', space=smem, size = 0x4, offset = 0x4, fixed_abs, tag = 'smem constant byte address 0x4 - core index']
  #allocation1 [shape = 'u32[144,128]{1,0:T(1,128)}', space=vmem, size = 0x12000, scoped, tag = 'internal scratch']
  #allocation2 [shape = 'f32[8,1]{1,0:T(8,128)}', space=vmem, size = 0x1000, scoped, tag = 'scratch operand']
  #allocation3 [shape = 'f32[8,1]{1,0:T(8,128)}', space=vmem, size = 0x1000, scoped, tag = 'scratch operand']
  #allocation4 [shape = 'f32[8,1]{1,0:T(8,128)}', space=vmem, size = 0x1000, scoped, tag = 'scratch operand']
  #allocation5 [shape = 'f32[8,1]{1,0:T(8,128)}', space=vmem, size = 0x1000, scoped, tag = 'scratch operand']
  %s0 = inlined_call_operand.vmem [shape: s32[8,1], index: 0, kind: input, shape index: {}]
  %s1 = inlined_call_operand.vmem [shape: f32[1,128], index: 1, kind: input, shape index: {}]
  %s2 = inlined_call_operand.vmem [shape: f32[8,32], index: 2, kind: input, shape index: {}]
  %s3 = inlined_call_operand.hbm [shape: f32[32,128], index: 3, kind: input, shape index: {}]
  %s4 = inlined_call_operand.hbm [shape: f32[8,128], index: 4, kind: output, shape index: {0}]
  %s5 = inlined_call_operand.vmem [shape: f32[8,1], index: 5, kind: output, shape index: {1}]
  %6 = xla_tuple %s4, %s5
  %s7 = sld [smem:[#allocation0]]
  $region46: #{tpu_custom_call.1} parent=0
    _
  %s9 = ssub.s32 1, %s7
  %s10 = scalar_select 0, %s9, %s7
  $region1: #{tpu_custom_call.1} parent=0
    #allocation6 [shape = 'u8[16384]{0}', space=vmem, size = 0x4000, scoped, tag = 'input window, operand 3, single buffered']
    #allocation7 [shape = 's32[1]{0}', space=sflag, size = 0x4, scoped, tag = 'scoped memory for tpu_custom_call.1']
    #allocation8 [shape = 's32[1]{0}', space=sflag, size = 0x4, scoped, tag = 'scoped memory for tpu_custom_call.1']
    #allocation9 [shape = 'u8[4096]{0}', space=vmem, size = 0x1000, scoped, tag = 'output window, operand 0, single buffered']
    %11 = vsyncpa [#allocation7], 0
    %12 = vsyncpa [#allocation8], 0
    // Predicated region
    $region2: #{tpu_custom_call.1} parent=1 // pred_check
      _
    $region3: #{tpu_custom_call.1} parent=1 // pred_check_branch
      %14 = sbr.rel (0) target = $region5
    $region4: #{tpu_custom_call.1} parent=1 // pred_region
      _
    $region5: #{tpu_custom_call.1} parent=1 // pred_fallthru
      _
    // Predicated region
    $region6: #{tpu_custom_call.1} parent=1 // pred_check
      _
    $region7: #{tpu_custom_call.1} parent=1 // pred_check_branch
      %16 = sbr.rel (0) target = $region9
    $region8: #{tpu_custom_call.1} parent=1 // pred_region
      _
    $region9: #{tpu_custom_call.1} parent=1 // pred_fallthru
      _
    // Predicated region
    $region10: #{tpu_custom_call.1} parent=1 // pred_check
      _
    $region11: #{tpu_custom_call.1} parent=1 // pred_check_branch
      %18 = sbr.rel (0) target = $region13
    $region12: #{tpu_custom_call.1} parent=1 // pred_region
      _
    $region13: #{tpu_custom_call.1} parent=1 // pred_fallthru
      _
    // Predicated region
    $region14: #{tpu_custom_call.1} parent=1 // pred_check
      _
    $region15: #{tpu_custom_call.1} parent=1 // pred_check_branch
      %20 = sbr.rel (0) target = $region17
    $region16: #{tpu_custom_call.1} parent=1 // pred_region
      %s22 = ssub.s32 512, 512
      %23 = vsyncadd [#allocation7], %s22
      %s24 = sshll.u32 [#allocation6], 4
      %s25 = int_to_ptr.vmem [resolvable:$true] %s24
      %30 = dma.hbm_to_vmem [thread:$0]  %s3, 512, %s25, [#allocation7], 128, 128, 8
    $region17: #{tpu_custom_call.1} parent=1 // pred_fallthru
      _
    // Predicated region
    $region18: #{tpu_custom_call.1} parent=1 // pred_check
      _
    $region19: #{tpu_custom_call.1} parent=1 // pred_check_branch
      %32 = sbr.rel (0) target = $region21
    $region20: #{tpu_custom_call.1} parent=1 // pred_region
      %33 = dma.done [#allocation7], 512
    $region21: #{tpu_custom_call.1} parent=1 // pred_fallthru
      _
    %v34 = vld [vmem:[%s2] sm:$0xff]
    %p35 = scmp.eq.s32.totalorder 0, 0
    // Predicated region
    $region22: #{tpu_custom_call.1} parent=1 // pred_check
      %p36 = pneg %p35
    $region23: #{tpu_custom_call.1} parent=1 // pred_check_branch
      %38 = sbr.rel (%p36) target = $region25
    $region24: #{tpu_custom_call.1} parent=1 // pred_region
      %v39 = vmul.f32 %v34, %v34
      %vm40 = vcmask 261120
      %v41 = vsel %vm40, %v39, 0.0
      %42 = vadd.xlane.f32.xlu0 %v41
      %v43 = vpop.xlane.xlu0 %42
      %v44 = vrsqrt.pop %v43
      %v45 = vmul.f32 %v43, %v44
      %vm46 = vcmp.eq.f32.partialorder %v43, inf
      %v47 = vsel %vm46, %v43, %v45
      %vm48 = vcmp.eq.f32.partialorder %v43, 0.0
      %v49 = vand.u32 %v43, 2147483648
      %v50 = vsel %vm48, %v49, %v47
      %v51 = vmax.f32 %v50, 1e-12
      %v52 = vrcp.pop %v51
      %v53 = vmul.f32 1.0, %v52
      %vm54 = vcmask 7168
      %55 = vst.msk [vmem:[#allocation2] sm:$0xff] %vm54, %v53
      %56 = vst.msk [vmem:[#allocation3] sm:$0xff] %vm54, -1e+30
      %57 = vst.msk [vmem:[#allocation4] sm:$0xff] %vm54, 0.0
      %58 = vst.msk [vmem:[#allocation5] sm:$0xff] %vm54, 0.0
    $region25: #{tpu_custom_call.1} parent=1 // pred_fallthru
      _
    %v59 = vld [vmem:[#allocation6] sm:$0xff]
    %v60 = vld [vmem:[#allocation6 + $0x8] sm:$0xff]
    %v61 = vld [vmem:[#allocation6 + $0x10] sm:$0xff]
    %v62 = vld [vmem:[#allocation6 + $0x18] sm:$0xff]
    %vm63 = vcmask 261120
    %v65 = vsel %vm63, %v34, 0
    %67 = vmatprep.subr.mxu0 0.0
    %68 = vmatpush1.msra.mxu0 0.0
    %69 = vmatprep.subr.mxu0 0.0
    %70 = vmatpush1.msra.mxu0 0.0
    %71 = vmatprep.subr.mxu0 0.0
    %72 = vmatpush1.msra.mxu0 0.0
    %73 = vmatprep.subr.mxu0 0.0
    %74 = vmatpush1.msra.mxu0 0.0
    %75 = vmatprep.subr.mxu0 0.0
    %76 = vmatpush1.msra.mxu0 0.0
    %77 = vmatprep.subr.mxu0 0.0
    %78 = vmatpush1.msra.mxu0 0.0
    %79 = vmatprep.subr.mxu0 0.0
    %80 = vmatpush1.msra.mxu0 0.0
    %81 = vmatprep.subr.mxu0 0.0
    %82 = vmatpush1.msra.mxu0 0.0
    %83 = vmatprep.subr.mxu0 0.0
    %84 = vmatpush1.msra.mxu0 0.0
    %85 = vmatprep.subr.mxu0 0.0
    %86 = vmatpush1.msra.mxu0 0.0
    %87 = vmatprep.subr.mxu0 0.0
    %88 = vmatpush1.msra.mxu0 0.0
    %89 = vmatprep.subr.mxu0 0.0
    %90 = vmatpush1.msra.mxu0 0.0
    %91 = vmatprep.subr.mxu0 0.0
    %92 = vmatpush1.msra.mxu0 %v62
    %93 = vmatprep.subr.mxu0 0.0
    %94 = vmatpush1.msra.mxu0 %v61
    %95 = vmatprep.subr.mxu0 0.0
    %96 = vmatpush1.msra.mxu0 %v60
    %97 = vmatprep.subr.mxu0 0.0
    %98 = vmatpush1.msra.mxu0 %v59
    %99 = vmatprep.subr.mxu0 0.0
    %100 = vmatpush2.msra.mxu0 0.0
    %101 = vmatprep.subr.mxu0 0.0
    %102 = vmatpush2.msra.mxu0 0.0
    %103 = vmatprep.subr.mxu0 0.0
    %104 = vmatpush2.msra.mxu0 0.0
    %105 = vmatprep.subr.mxu0 0.0
    %106 = vmatpush2.msra.mxu0 0.0
    %107 = vmatprep.subr.mxu0 0.0
    %108 = vmatpush2.msra.mxu0 0.0
    %109 = vmatprep.subr.mxu0 0.0
    %110 = vmatpush2.msra.mxu0 0.0
    %111 = vmatprep.subr.mxu0 0.0
    %112 = vmatpush2.msra.mxu0 0.0
    %113 = vmatprep.subr.mxu0 0.0
    %114 = vmatpush2.msra.mxu0 0.0
    %115 = vmatprep.subr.mxu0 0.0
    %116 = vmatpush2.msra.mxu0 0.0
    %117 = vmatprep.subr.mxu0 0.0
    %118 = vmatpush2.msra.mxu0 0.0
    %119 = vmatprep.subr.mxu0 0.0
    %120 = vmatpush2.msra.mxu0 0.0
    %121 = vmatprep.subr.mxu0 0.0
    %122 = vmatpush2.msra.mxu0 0.0
    %123 = vmatprep.subr.mxu0 0.0
    %124 = vmatpush2.msra.mxu0 0.0
    %125 = vmatprep.subr.mxu0 0.0
    %126 = vmatpush2.msra.mxu0 0.0
    %127 = vmatprep.subr.mxu0 0.0
    %128 = vmatpush2.msra.mxu0 0.0
    %129 = vmatprep.subr.mxu0 0.0
    %130 = vmatpush2.msra.mxu0 0.0
    %131 = vmatprep.mubr.f32.mxu0 0.0
    %132 = vmatmul.mubr.f32.gmra.mxu0 %v65
    %v133 = vpop.f32.mrf.mxu0
    %v134 = vadd.f32 0.0, %v133
    %v135 = vpop.f32.mrf.mxu0
    %136 = vdwg.mxu0
    %v137 = vld [vmem:[#allocation2] sm:$0xff]
    %139 = vset.pattern.permute.xlu0 0
    %140 = vperm.xlu0 %139, %v137
    %v141 = vpop.permute.xlu0 %140
    %v143 = vmul.f32 %v134, %v141
    %v144 = vld [vmem:[%s1] sm:$0x1]
    %v146 = vlaneseq
    %v147 = vshrl.u32 %v146, 7
    %v148 = vsub.s32 0, %v147
    %v149 = vrot.slane %v144, %v148
    %v151 = vmul.f32 %v143, %v149
    %v152 = vld [vmem:[%s0] sm:$0xff]
    %v153 = vlaneseq
    %v154 = vand.u32 %v153, 127
    %s155 = smul.u32 0, 128
    %v156 = vstv %s155
    %v157 = vadd.s32 %v154, %v156
    %158 = vset.pattern.permute.xlu0 0
    %159 = vperm.xlu0 %158, %v152
    %v160 = vpop.permute.xlu0 %159
    %vm161 = vcmp.eq.s32.totalorder %v157, %v160
    %v162 = vsub.f32 %v151, 10.5
    %v163 = vsel %vm161, %v162, %v151
    %164 = vst [vmem:[#allocation9] sm:$0xff] %v163
    %vm165 = vcmp.lt.s32.totalorder %v157, 10
    %v166 = vsel %vm165, 1, 0
    %vm167 = vcmp.eq.s32.totalorder %v166, 1
    %v168 = vsel %vm167, %v163, -1e+30
    %169 = vmax.xlane.f32.xlu0 %v168
    %v170 = vpop.xlane.xlu0 %169
    %v171 = vld [vmem:[#allocation3] sm:$0xff]
    %v172 = vmax.f32 %v171, %v170
    %v173 = vsub.f32 %v171, %v172
    %v174 = vmul.f32 %v173, 1.442695
    %v175 = vpow.pop %v174
    %v176 = vld [vmem:[#allocation4] sm:$0xff]
    %v177 = vmul.f32 %v175, %v176
    %179 = vset.pattern.permute.xlu0 0
    %180 = vperm.xlu0 %179, %v172
    %v181 = vpop.permute.xlu0 %180
    %v183 = vsub.f32 %v168, %v181
    %v184 = vmul.f32 %v183, 1.442695
    %v185 = vpow.pop %v184
    %186 = vadd.xlane.f32.xlu0 %v185
    %v187 = vpop.xlane.xlu0 %186
    %v188 = vadd.f32 %v177, %v187
    %vm189 = vcmask 7168
    %190 = vst.msk [vmem:[#allocation4] sm:$0xff] %vm189, %v188
    %191 = vst.msk [vmem:[#allocation3] sm:$0xff] %vm189, %v172
    %v192 = vld [vmem:[#allocation5] sm:$0xff]
    %v193 = vsel %vm161, %v162, 0.0
    %194 = vadd.xlane.f32.xlu0 %v193
    %v195 = vpop.xlane.xlu0 %194
    %v196 = vadd.f32 %v192, %v195
    %197 = vst.msk [vmem:[#allocation5] sm:$0xff] %vm189, %v196
    // Predicated region
    $region26: #{tpu_custom_call.1} parent=1 // pred_check
      %p198 = pneg %p35
    $region27: #{tpu_custom_call.1} parent=1 // pred_check_branch
      %200 = sbr.rel (%p198) target = $region29
    $region28: #{tpu_custom_call.1} parent=1 // pred_region
      %v201 = vld [vmem:[#allocation3] sm:$0xff]
      %v202 = vld [vmem:[#allocation4] sm:$0xff]
      %v203 = vlog2.pop %v202
      %v204 = vmul.f32 %v203, 0.6931472
      %v205 = vadd.f32 %v201, %v204
      %v206 = vld [vmem:[#allocation5] sm:$0xff]
      %v207 = vsub.f32 %v205, %v206
      %208 = vst.msk [vmem:[%s5] sm:$0xff] %vm189, %v207
    $region29: #{tpu_custom_call.1} parent=1 // pred_fallthru
      _
    // Predicated region
    $region30: #{tpu_custom_call.1} parent=1 // pred_check
      _
    $region31: #{tpu_custom_call.1} parent=1 // pred_check_branch
      %210 = sbr.rel (0) target = $region33
    $region32: #{tpu_custom_call.1} parent=1 // pred_region
      %s212 = ssub.s32 128, 128
      %213 = vsyncadd [#allocation8], %s212
      %s215 = sshll.u32 [#allocation9], 4
      %s216 = int_to_ptr.vmem [resolvable:$true] %s215
      %218 = dma.vmem_to_hbm [thread:$0]  %s216, 128, %s4, [#allocation8]
    $region33: #{tpu_custom_call.1} parent=1 // pred_fallthru
      _
    // Predicated region
    $region34: #{tpu_custom_call.1} parent=1 // pred_check
      _
    $region35: #{tpu_custom_call.1} parent=1 // pred_check_branch
      %220 = sbr.rel (0) target = $region37
    $region36: #{tpu_custom_call.1} parent=1 // pred_region
      _
    $region37: #{tpu_custom_call.1} parent=1 // pred_fallthru
      _
    // Predicated region
    $region38: #{tpu_custom_call.1} parent=1 // pred_check
      _
    $region39: #{tpu_custom_call.1} parent=1 // pred_check_branch
      %222 = sbr.rel (0) target = $region41
    $region40: #{tpu_custom_call.1} parent=1 // pred_region
      %223 = dma.done [#allocation8], 128
    $region41: #{tpu_custom_call.1} parent=1 // pred_fallthru
      _
    // Predicated region
    $region42: #{tpu_custom_call.1} parent=1 // pred_check
      _
    $region43: #{tpu_custom_call.1} parent=1 // pred_check_branch
      %225 = sbr.rel (0) target = $region45
    $region44: #{tpu_custom_call.1} parent=1 // pred_region
      _
    $region45: #{tpu_custom_call.1} parent=1 // pred_fallthru
      _
    %226 = vsyncpa [#allocation7], 1
    %227 = vsyncpa [#allocation8], 1

</llo_original>
